<compile_context>
chip_gen: v7x
topology: tpu7x:2x2x1
jax: 0.10.0
libtpu: 0.0.40
codegen_flags: <defaults>
</compile_context>

<pallas_src>
import functools

import jax
import jax.numpy as jnp
from jax import lax
from jax.experimental import pallas as pl
from jax.experimental.pallas import tpu as pltpu

_LANES = 128
_CHUNK_ROWS = 64  # inner-loop chunk: 64 rows x 128 lanes (8 f32 vregs per input)


def _round_up(x, m):
    return ((x + m - 1) // m) * m


def _cdiv(a, b):
    return (a + b - 1) // b


def _chip_profile():
    """Per-generation streaming parameters derived from the local device kind."""
    kind = ""
    try:
        kind = jax.devices()[0].device_kind.lower()
    except Exception:  # no device info -> conservative defaults
        pass
    if "v7" in kind:
        # v7x: ~3.2 TB/s HBM, 64 MiB VMEM, 2 TensorCores -> big blocks + 2-way split.
        return {"block_bytes": 4 << 20, "num_splits": 2, "core_parallel": True}
    if "v6" in kind:
        # v6e: 1 TC, 32 MiB scoped-VMEM default -> big blocks, no split.
        return {"block_bytes": 4 << 20, "num_splits": 1, "core_parallel": False}
    # v5e / unknown: 16 MiB scoped-VMEM default, slower HBM -> 2 MiB blocks.
    return {"block_bytes": 2 << 20, "num_splits": 1, "core_parallel": False}


def _make_partial_kernel(tile_rows, chunk_rows, nblk, full_rows, rem):
    """Kernel accumulating per-lane partials of p*t, p, t into one (24,128) block."""
    n_chunks = tile_rows // chunk_rows
    groups = chunk_rows // 8

    def kernel(p_ref, t_ref, acc_ref):
        k = pl.program_id(1)

        @pl.when(k == 0)
        def _():
            acc_ref[...] = jnp.zeros_like(acc_ref)

        # Logical (un-clamped) block index.  The index_map clamps the DMA into
        # bounds; the row/lane mask below zeroes duplicated or out-of-range data.
        blk = pl.program_id(0) * nblk + k
        row0 = blk * tile_rows

        def chunk_body(i, carry, masked):
            a_pt, a_p, a_t = carry
            start = pl.multiple_of(i * chunk_rows, chunk_rows)
            p = p_ref[pl.ds(start, chunk_rows), :].astype(jnp.float32)
            t = t_ref[pl.ds(start, chunk_rows), :].astype(jnp.float32)
            if masked:
                lrow = lax.broadcasted_iota(jnp.int32, (chunk_rows, _LANES), 0)
                lane = lax.broadcasted_iota(jnp.int32, (chunk_rows, _LANES), 1)
                grow = row0 + i * chunk_rows + lrow
                valid = (grow < full_rows) | ((grow == full_rows) & (lane < rem))
                p = jnp.where(valid, p, 0.0)
                t = jnp.where(valid, t, 0.0)
            prod = p * t
            # Regrouping rows by 8 matches vreg boundaries: the reshapes are
            # layout no-ops and the axis-0 sums are plain VPU vector adds.
            a_pt = a_pt + prod.reshape(groups, 8, _LANES).sum(axis=0)
            a_p = a_p + p.reshape(groups, 8, _LANES).sum(axis=0)
            a_t = a_t + t.reshape(groups, 8, _LANES).sum(axis=0)
            return a_pt, a_p, a_t

        def run(masked):
            z = jnp.zeros((8, _LANES), jnp.float32)
            a_pt, a_p, a_t = lax.fori_loop(
                0, n_chunks, functools.partial(chunk_body, masked=masked), (z, z, z))
            # Single writeback of the fused accumulators per grid step.
            acc_ref[0:8, :] += a_pt
            acc_ref[8:16, :] += a_p
            acc_ref[16:24, :] += a_t

        fully_valid = row0 + tile_rows <= full_rows

        @pl.when(fully_valid)
        def _():
            run(masked=False)

        @pl.when(jnp.logical_not(fully_valid))
        def _():
            run(masked=True)

    return kernel


def tversky_loss(preds, targets, alpha=0.7, beta=0.3):
    assert preds.shape == targets.shape, (preds.shape, targets.shape)
    p = jnp.ravel(preds)  # free reshape; keep native dtype (no f32 blow-up in HBM)
    t = jnp.ravel(targets)
    n = int(p.shape[0])

    prof = _chip_profile()
    ip = jnp.dtype(p.dtype).itemsize
    it = jnp.dtype(t.dtype).itemsize

    full_rows, rem = divmod(n, _LANES)
    rows = full_rows + (1 if rem else 0)

    if rem:
        # Minimal lane-alignment pad (zeros are exact; the in-kernel mask also
        # excludes them).  Only hit for n % 128 != 0.
        # TODO(synk): stream the <128-element ragged tail via a separate 1-D
        # tail block to avoid this full-array pad copy for unaligned shapes.
        p = jnp.pad(p, (0, rows * _LANES - n))
        t = jnp.pad(t, (0, rows * _LANES - n))

    # Constant bytes-per-step: size the tile so the widest input streams about
    # prof["block_bytes"] per grid step, rounded down to the chunk multiple.
    tile_rows_big = max(
        _CHUNK_ROWS,
        (prof["block_bytes"] // (_LANES * max(ip, it))) // _CHUNK_ROWS * _CHUNK_ROWS,
    )

    if rows <= tile_rows_big:
        # Small input: single block covering everything -> no pipeline/per-step
        # overhead.  Row-pad (tiny arrays, negligible cost) to the chunk multiple.
        num_splits = 1
        nblk = 1
        tile_rows = _round_up(max(rows, _CHUNK_ROWS), _CHUNK_ROWS)
        p2 = p.reshape(rows, _LANES)
        t2 = t.reshape(rows, _LANES)
        if tile_rows != rows:
            p2 = jnp.pad(p2, ((0, tile_rows - rows), (0, 0)))
            t2 = jnp.pad(t2, ((0, tile_rows - rows), (0, 0)))
    else:
        # Large input: big tiles, NO padding.  Partial / duplicated trailing
        # blocks are handled by the index-map clamp + in-kernel mask.
        num_splits = prof["num_splits"]
        tile_rows = tile_rows_big
        nblk = _cdiv(_cdiv(rows, tile_rows), num_splits)
        p2 = p.reshape(rows, _LANES)
        t2 = t.reshape(rows, _LANES)

    nblk_valid = _cdiv(max(rows, 1), tile_rows)
    last_blk = nblk_valid - 1

    def in_map(c, k):
        # Clamp so the DMA never targets a fully out-of-bounds block; the
        # kernel's mask (computed from the un-clamped index) zeroes duplicates.
        return (jnp.minimum(c * nblk + k, last_blk), 0)

    def out_map(c, k):
        return (c, 0)

    kernel = _make_partial_kernel(tile_rows, _CHUNK_ROWS, nblk, full_rows, rem)

    out_shape = jax.ShapeDtypeStruct((num_splits * 24, _LANES), jnp.float32)
    # 2 inputs x 2 pipeline buffers + margin for outputs / internal scratch.
    vmem_limit = int(max(16 << 20, 2 * tile_rows * _LANES * (ip + it) + (8 << 20)))
    cost = pl.CostEstimate(
        flops=4 * n,
        transcendentals=0,
        bytes_accessed=int(n * (ip + it) + num_splits * 24 * _LANES * 4),
    )

    if num_splits > 1 and prof["core_parallel"]:
        # Prefer CORE_PARALLEL so the split actually lands on v7x's two TCs;
        # fall back to PARALLEL if the compiler rejects it.
        sem_list = [(pltpu.CORE_PARALLEL, pltpu.ARBITRARY),
                    (pltpu.PARALLEL, pltpu.ARBITRARY)]
    else:
        sem_list = [(pltpu.PARALLEL, pltpu.ARBITRARY)]

    parts = None
    last_err = None
    for sem in sem_list:
        try:
            parts = pl.pallas_call(
                kernel,
                out_shape=out_shape,
                grid_spec=pltpu.PrefetchScalarGridSpec(
                    num_scalar_prefetch=0,
                    grid=(num_splits, nblk),
                    in_specs=[
                        pl.BlockSpec((tile_rows, _LANES), in_map),
                        pl.BlockSpec((tile_rows, _LANES), in_map),
                    ],
                    out_specs=pl.BlockSpec((24, _LANES), out_map),
                ),
                compiler_params=pltpu.CompilerParams(
                    dimension_semantics=sem,
                    vmem_limit_bytes=vmem_limit,
                ),
                cost_estimate=cost,
            )(p2, t2)
            break
        except Exception as e:  # e.g. CORE_PARALLEL unsupported -> fall back
            last_err = e
    if parts is None:
        raise last_err

    # Tiny epilogue: a single reduction over the fused (num_splits,3,8,128) partials.
    sums = parts.reshape(num_splits, 3, 8, _LANES).sum(axis=(0, 2, 3))
    tp, sum_p, sum_t = sums[0], sums[1], sums[2]
    fn = sum_t - tp  # == sum((1 - p) * t)
    fp = sum_p - tp  # == sum(p * (1 - t))
    smooth = jnp.float32(1e-6)
    tversky = (tp + smooth) / (
        tp + jnp.float32(alpha) * fn + jnp.float32(beta) * fp + smooth)
    return jnp.float32(1.0) - tversky


def _tversky_ref(preds, targets, alpha=0.7, beta=0.3):
    smooth = 1e-6
    p = preds.astype(jnp.float32)
    t = targets.astype(jnp.float32)
    tp = jnp.sum(p * t)
    fn = jnp.sum((1.0 - p) * t)
    fp = jnp.sum(p * (1.0 - t))
    tversky = (tp + smooth) / (tp + alpha * fn + beta * fp + smooth)
    return 1.0 - tversky


if __name__ == "__main__":
    key = jax.random.PRNGKey(0)
    k1, k2, k3, k4, k5, k6 = jax.random.split(key, 6)

    # Small segmentation-style NCHW input [2, 4, 16, 16] (single-block path).
    preds_s = jax.nn.sigmoid(jax.random.normal(k1, (2, 4, 16, 16), jnp.float32))
    targets_s = (jax.random.uniform(k2, (2, 4, 16, 16)) > 0.5).astype(jnp.float32)
    loss_s = tversky_loss(preds_s, targets_s)
    jax.block_until_ready(loss_s)
    ref_s = _tversky_ref(preds_s, targets_s)
    assert jnp.allclose(loss_s, ref_s, atol=1e-5, rtol=1e-5), (loss_s, ref_s)

    # Lane-unaligned shape (n % 128 != 0) exercising the ragged-tail mask.
    preds_r = jax.nn.sigmoid(jax.random.normal(k3, (2, 3, 7, 11), jnp.float32))
    targets_r = (jax.random.uniform(k4, (2, 3, 7, 11)) > 0.5).astype(jnp.float32)
    loss_r = tversky_loss(preds_r, targets_r)
    jax.block_until_ready(loss_r)
    ref_r = _tversky_ref(preds_r, targets_r)
    assert jnp.allclose(loss_r, ref_r, atol=1e-5, rtol=1e-5), (loss_r, ref_r)

    # Larger input exercising the tiled path with a partial last block
    # (handled in-kernel by masking; no jnp.pad on this path).
    preds_l = jax.nn.sigmoid(jax.random.normal(k5, (3, 4, 300, 512), jnp.float32))
    targets_l = (jax.random.uniform(k6, (3, 4, 300, 512)) > 0.5).astype(jnp.float32)
    loss_l = tversky_loss(preds_l, targets_l)
    jax.block_until_ready(loss_l)
    ref_l = _tversky_ref(preds_l, targets_l)
    assert jnp.allclose(loss_l, ref_l, atol=1e-4, rtol=1e-4), (loss_l, ref_l)

    print("KERNEL_OK")
</pallas_src>

<mosaic_0001>
module attributes {stable_mosaic.version = 11 : i64} {
  func.func @kernel(%arg0: i32, %arg1: i32, %arg2: memref<64x128xf32, #tpu.memory_space<vmem>>, %arg3: memref<64x128xf32, #tpu.memory_space<vmem>>, %arg4: memref<24x128xf32, #tpu.memory_space<vmem>>) attributes {dimension_semantics = [#tpu.dimension_semantics<parallel>, #tpu.dimension_semantics<arbitrary>], iteration_bounds = array<i64: 1, 1>, scalar_prefetch = 0 : i64, scratch_operands = 0 : i64, tpu.core_type = #tpu.core_type<tc>, window_params = [{transform_indices = @transform_0, window_bounds = array<i64: 64, 128>}, {transform_indices = @transform_1, window_bounds = array<i64: 64, 128>}, {transform_indices = @transform_2, window_bounds = array<i64: 24, 128>}]} {
    %c0_i32 = arith.constant 0 : i32
    %0 = arith.cmpi eq, %arg1, %c0_i32 : i32
    %1 = arith.extui %0 : i1 to i32
    %c0_i32_0 = arith.constant 0 : i32
    %2 = arith.cmpi ne, %1, %c0_i32_0 : i32
    scf.if %2 {
      %cst = arith.constant 0.000000e+00 : f32
      %13 = vector.broadcast %cst : f32 to vector<24x128xf32>
      %c0 = arith.constant 0 : index
      %c0_4 = arith.constant 0 : index
      %14 = vector.load %arg4[%c0, %c0_4] : memref<24x128xf32, #tpu.memory_space<vmem>>, vector<24x128xf32>
      tpu.vector_store %arg4[%c0, %c0_4], %13 {strides = array<i32>} : memref<24x128xf32, #tpu.memory_space<vmem>>, vector<24x128xf32>,
    } else {
    }
    %c1_i32 = arith.constant 1 : i32
    %3 = arith.muli %arg0, %c1_i32 : i32
    %4 = arith.addi %3, %arg1 : i32
    %c64_i32 = arith.constant 64 : i32
    %5 = arith.muli %4, %c64_i32 : i32
    %c64_i32_1 = arith.constant 64 : i32
    %6 = arith.addi %5, %c64_i32_1 : i32
    %c16_i32 = arith.constant 16 : i32
    %7 = arith.cmpi sle, %6, %c16_i32 : i32
    %8 = arith.extui %7 : i1 to i32
    %c0_i32_2 = arith.constant 0 : i32
    %9 = arith.cmpi ne, %8, %c0_i32_2 : i32
    scf.if %9 {
      %cst = arith.constant 0.000000e+00 : f32
      %13 = vector.broadcast %cst : f32 to vector<8x128xf32>
      %c0_i32_4 = arith.constant 0 : i32
      %c64_i32_5 = arith.constant 64 : i32
      %14 = arith.muli %c0_i32_4, %c64_i32_5 : i32
      %15 = tpu.assume_multiple %14, 64 : i32
      %16 = arith.index_cast %15 : i32 to index
      %c0 = arith.constant 0 : index
      %17 = vector.load %arg2[%16, %c0] : memref<64x128xf32, #tpu.memory_space<vmem>>, vector<64x128xf32>
      %18 = arith.index_cast %15 : i32 to index
      %c0_6 = arith.constant 0 : index
      %19 = vector.load %arg3[%18, %c0_6] : memref<64x128xf32, #tpu.memory_space<vmem>>, vector<64x128xf32>
      %20 = arith.mulf %17, %19 : vector<64x128xf32>
      %21 = vector.shape_cast %20 : vector<64x128xf32> to vector<8x8x128xf32>
      %cst_7 = arith.constant dense<0.000000e+00> : vector<8x128xf32>
      %22 = vector.multi_reduction <add>, %21, %cst_7 [0] : vector<8x8x128xf32> to vector<8x128xf32>
      %23 = arith.addf %13, %22 : vector<8x128xf32>
      %24 = vector.shape_cast %17 : vector<64x128xf32> to vector<8x8x128xf32>
      %cst_8 = arith.constant dense<0.000000e+00> : vector<8x128xf32>
      %25 = vector.multi_reduction <add>, %24, %cst_8 [0] : vector<8x8x128xf32> to vector<8x128xf32>
      %26 = arith.addf %13, %25 : vector<8x128xf32>
      %27 = vector.shape_cast %19 : vector<64x128xf32> to vector<8x8x128xf32>
      %cst_9 = arith.constant dense<0.000000e+00> : vector<8x128xf32>
      %28 = vector.multi_reduction <add>, %27, %cst_9 [0] : vector<8x8x128xf32> to vector<8x128xf32>
      %29 = arith.addf %13, %28 : vector<8x128xf32>
      %c1_i32_10 = arith.constant 1 : i32
      %c0_11 = arith.constant 0 : index
      %c0_12 = arith.constant 0 : index
      %30 = vector.load %arg4[%c0_11, %c0_12] : memref<24x128xf32, #tpu.memory_space<vmem>>, vector<8x128xf32>
      %31 = arith.addf %30, %23 : vector<8x128xf32>
      %c0_13 = arith.constant 0 : index
      %c0_14 = arith.constant 0 : index
      %32 = vector.load %arg4[%c0_13, %c0_14] : memref<24x128xf32, #tpu.memory_space<vmem>>, vector<8x128xf32>
      tpu.vector_store %arg4[%c0_13, %c0_14], %31 {strides = array<i32>} : memref<24x128xf32, #tpu.memory_space<vmem>>, vector<8x128xf32>,
      %c8 = arith.constant 8 : index
      %c0_15 = arith.constant 0 : index
      %33 = vector.load %arg4[%c8, %c0_15] : memref<24x128xf32, #tpu.memory_space<vmem>>, vector<8x128xf32>
      %34 = arith.addf %33, %26 : vector<8x128xf32>
      %c8_16 = arith.constant 8 : index
      %c0_17 = arith.constant 0 : index
      %35 = vector.load %arg4[%c8_16, %c0_17] : memref<24x128xf32, #tpu.memory_space<vmem>>, vector<8x128xf32>
      tpu.vector_store %arg4[%c8_16, %c0_17], %34 {strides = array<i32>} : memref<24x128xf32, #tpu.memory_space<vmem>>, vector<8x128xf32>,
      %c16 = arith.constant 16 : index
      %c0_18 = arith.constant 0 : index
      %36 = vector.load %arg4[%c16, %c0_18] : memref<24x128xf32, #tpu.memory_space<vmem>>, vector<8x128xf32>
      %37 = arith.addf %36, %29 : vector<8x128xf32>
      %c16_19 = arith.constant 16 : index
      %c0_20 = arith.constant 0 : index
      %38 = vector.load %arg4[%c16_19, %c0_20] : memref<24x128xf32, #tpu.memory_space<vmem>>, vector<8x128xf32>
      tpu.vector_store %arg4[%c16_19, %c0_20], %37 {strides = array<i32>} : memref<24x128xf32, #tpu.memory_space<vmem>>, vector<8x128xf32>,
    } else {
    }
    %true = arith.constant true
    %10 = arith.xori %7, %true : i1
    %11 = arith.extui %10 : i1 to i32
    %c0_i32_3 = arith.constant 0 : i32
    %12 = arith.cmpi ne, %11, %c0_i32_3 : i32
    scf.if %12 {
      %cst = arith.constant 0.000000e+00 : f32
      %13 = vector.broadcast %cst : f32 to vector<8x128xf32>
      %c0_i32_4 = arith.constant 0 : i32
      %c64_i32_5 = arith.constant 64 : i32
      %14 = arith.muli %c0_i32_4, %c64_i32_5 : i32
      %15 = tpu.assume_multiple %14, 64 : i32
      %16 = arith.index_cast %15 : i32 to index
      %c0 = arith.constant 0 : index
      %17 = vector.load %arg2[%16, %c0] : memref<64x128xf32, #tpu.memory_space<vmem>>, vector<64x128xf32>
      %18 = arith.index_cast %15 : i32 to index
      %c0_6 = arith.constant 0 : index
      %19 = vector.load %arg3[%18, %c0_6] : memref<64x128xf32, #tpu.memory_space<vmem>>, vector<64x128xf32>
      %20 = tpu.iota {dimensions = array<i32: 0>} : vector<64x128xi32>
      %21 = tpu.iota {dimensions = array<i32: 1>} : vector<64x128xi32>
      %c64_i32_7 = arith.constant 64 : i32
      %22 = arith.muli %c0_i32_4, %c64_i32_7 : i32
      %23 = arith.addi %5, %22 : i32
      %24 = vector.broadcast %23 : i32 to vector<64x128xi32>
      %25 = arith.addi %24, %20 : vector<64x128xi32>
      %c16_i32_8 = arith.constant 16 : i32
      %26 = vector.broadcast %c16_i32_8 : i32 to vector<64x128xi32>
      %27 = arith.cmpi slt, %25, %26 : vector<64x128xi32>
      %c16_i32_9 = arith.constant 16 : i32
      %28 = vector.broadcast %c16_i32_9 : i32 to vector<64x128xi32>
      %29 = arith.cmpi eq, %25, %28 : vector<64x128xi32>
      %c0_i32_10 = arith.constant 0 : i32
      %30 = vector.broadcast %c0_i32_10 : i32 to vector<64x128xi32>
      %31 = arith.cmpi slt, %21, %30 : vector<64x128xi32>
      %32 = arith.andi %29, %31 : vector<64x128xi1>
      %33 = arith.ori %27, %32 : vector<64x128xi1>
      %cst_11 = arith.constant 0.000000e+00 : f32
      %34 = vector.broadcast %cst_11 : f32 to vector<64x128xf32>
      %35 = arith.select %33, %17, %34 : vector<64x128xi1>, vector<64x128xf32>
      %cst_12 = arith.constant 0.000000e+00 : f32
      %36 = vector.broadcast %cst_12 : f32 to vector<64x128xf32>
      %37 = arith.select %33, %19, %36 : vector<64x128xi1>, vector<64x128xf32>
      %38 = arith.mulf %35, %37 : vector<64x128xf32>
      %39 = vector.shape_cast %38 : vector<64x128xf32> to vector<8x8x128xf32>
      %cst_13 = arith.constant dense<0.000000e+00> : vector<8x128xf32>
      %40 = vector.multi_reduction <add>, %39, %cst_13 [0] : vector<8x8x128xf32> to vector<8x128xf32>
      %41 = arith.addf %13, %40 : vector<8x128xf32>
      %42 = vector.shape_cast %35 : vector<64x128xf32> to vector<8x8x128xf32>
      %cst_14 = arith.constant dense<0.000000e+00> : vector<8x128xf32>
      %43 = vector.multi_reduction <add>, %42, %cst_14 [0] : vector<8x8x128xf32> to vector<8x128xf32>
      %44 = arith.addf %13, %43 : vector<8x128xf32>
      %45 = vector.shape_cast %37 : vector<64x128xf32> to vector<8x8x128xf32>
      %cst_15 = arith.constant dense<0.000000e+00> : vector<8x128xf32>
      %46 = vector.multi_reduction <add>, %45, %cst_15 [0] : vector<8x8x128xf32> to vector<8x128xf32>
      %47 = arith.addf %13, %46 : vector<8x128xf32>
      %c1_i32_16 = arith.constant 1 : i32
      %c0_17 = arith.constant 0 : index
      %c0_18 = arith.constant 0 : index
      %48 = vector.load %arg4[%c0_17, %c0_18] : memref<24x128xf32, #tpu.memory_space<vmem>>, vector<8x128xf32>
      %49 = arith.addf %48, %41 : vector<8x128xf32>
      %c0_19 = arith.constant 0 : index
      %c0_20 = arith.constant 0 : index
      %50 = vector.load %arg4[%c0_19, %c0_20] : memref<24x128xf32, #tpu.memory_space<vmem>>, vector<8x128xf32>
      tpu.vector_store %arg4[%c0_19, %c0_20], %49 {strides = array<i32>} : memref<24x128xf32, #tpu.memory_space<vmem>>, vector<8x128xf32>,
      %c8 = arith.constant 8 : index
      %c0_21 = arith.constant 0 : index
      %51 = vector.load %arg4[%c8, %c0_21] : memref<24x128xf32, #tpu.memory_space<vmem>>, vector<8x128xf32>
      %52 = arith.addf %51, %44 : vector<8x128xf32>
      %c8_22 = arith.constant 8 : index
      %c0_23 = arith.constant 0 : index
      %53 = vector.load %arg4[%c8_22, %c0_23] : memref<24x128xf32, #tpu.memory_space<vmem>>, vector<8x128xf32>
      tpu.vector_store %arg4[%c8_22, %c0_23], %52 {strides = array<i32>} : memref<24x128xf32, #tpu.memory_space<vmem>>, vector<8x128xf32>,
      %c16 = arith.constant 16 : index
      %c0_24 = arith.constant 0 : index
      %54 = vector.load %arg4[%c16, %c0_24] : memref<24x128xf32, #tpu.memory_space<vmem>>, vector<8x128xf32>
      %55 = arith.addf %54, %47 : vector<8x128xf32>
      %c16_25 = arith.constant 16 : index
      %c0_26 = arith.constant 0 : index
      %56 = vector.load %arg4[%c16_25, %c0_26] : memref<24x128xf32, #tpu.memory_space<vmem>>, vector<8x128xf32>
      tpu.vector_store %arg4[%c16_25, %c0_26], %55 {strides = array<i32>} : memref<24x128xf32, #tpu.memory_space<vmem>>, vector<8x128xf32>,
    } else {
    }
    return
  }
  func.func @transform_0(%arg0: i32, %arg1: i32) -> (i32, i32) {
    %c1_i32 = arith.constant 1 : i32
    %0 = arith.muli %arg0, %c1_i32 : i32
    %1 = arith.addi %0, %arg1 : i32
    %c0_i32 = arith.constant 0 : i32
    %2 = arith.minsi %1, %c0_i32 : i32
    %c0_i32_0 = arith.constant 0 : i32
    %c0_i32_1 = arith.constant 0 : i32
    return %2, %c0_i32_0 : i32, i32
  }
  func.func @transform_1(%arg0: i32, %arg1: i32) -> (i32, i32) {
    %c1_i32 = arith.constant 1 : i32
    %0 = arith.muli %arg0, %c1_i32 : i32
    %1 = arith.addi %0, %arg1 : i32
    %c0_i32 = arith.constant 0 : i32
    %2 = arith.minsi %1, %c0_i32 : i32
    %c0_i32_0 = arith.constant 0 : i32
    %c0_i32_1 = arith.constant 0 : i32
    return %2, %c0_i32_0 : i32, i32
  }
  func.func @transform_2(%arg0: i32, %arg1: i32) -> (i32, i32) {
    %c0_i32 = arith.constant 0 : i32
    %c0_i32_0 = arith.constant 0 : i32
    return %arg0, %c0_i32 : i32, i32
  }
}

</mosaic_0001>

<llo_original>
// kernel: tpu_custom_call.1
$region0: #{tpu_custom_call.1}
  #allocation0 [shape = 'u32[]', space=smem, size = 0x4, offset = 0x4, fixed_abs, tag = 'smem constant byte address 0x4 - core index']
  #allocation1 [shape = 'u32[144,128]{1,0:T(1,128)}', space=vmem, size = 0x12000, scoped, tag = 'internal scratch']
  %s0 = inlined_call_operand.hbm [shape: f32[64,128], index: 0, kind: input, shape index: {}]
  %s1 = inlined_call_operand.hbm [shape: f32[64,128], index: 1, kind: input, shape index: {}]
  %s2 = inlined_call_operand.hbm [shape: f32[24,128], index: 2, kind: output, shape index: {}]
  %s3 = sld [smem:[#allocation0]]
  $region38: #{tpu_custom_call.1} parent=0
    _
  %s5 = ssub.s32 1, %s3
  %s6 = scalar_select 0, %s5, %s3
  $region1: #{tpu_custom_call.1} parent=0
    #allocation2 [shape = 'u8[32768]{0}', space=vmem, size = 0x8000, scoped, tag = 'input window, operand 0, single buffered']
    #allocation3 [shape = 's32[1]{0}', space=sflag, size = 0x4, scoped, tag = 'scoped memory for tpu_custom_call.1']
    #allocation4 [shape = 's32[1]{0}', space=sflag, size = 0x4, scoped, tag = 'scoped memory for tpu_custom_call.1']
    #allocation5 [shape = 'u8[32768]{0}', space=vmem, size = 0x8000, scoped, tag = 'input window, operand 1, single buffered']
    #allocation6 [shape = 's32[1]{0}', space=sflag, size = 0x4, scoped, tag = 'scoped memory for tpu_custom_call.1']
    #allocation7 [shape = 'u8[12288]{0}', space=vmem, size = 0x3000, scoped, tag = 'output window, operand 0, single buffered']
    %7 = vsyncpa [#allocation3], 0
    %8 = vsyncpa [#allocation6], 0
    %9 = vsyncpa [#allocation4], 0
    // Predicated region
    $region2: #{tpu_custom_call.1} parent=1 // pred_check
      _
    $region3: #{tpu_custom_call.1} parent=1 // pred_check_branch
      %11 = sbr.rel (0) target = $region5
    $region4: #{tpu_custom_call.1} parent=1 // pred_region
      %s12 = sadd.s32 0, 0
      %p13 = scmp.lt.s32.totalorder %s12, 0
      %s14 = scalar_select %p13, %s12, 0
      %s15 = smul.u32 8, %s14
      %s17 = ssub.s32 1024, 1024
      %18 = vsyncadd [#allocation3], %s17
      %s19 = smul.addr %s15, 128
      %s20 = scalar_lea.hbm %s0, %s19
      %s21 = sshll.u32 [#allocation2], 4
      %s22 = int_to_ptr.vmem [resolvable:$true] %s21
      %27 = dma.hbm_to_vmem [thread:$0]  %s20, 1024, %s22, [#allocation3], 128, 128, 8
    $region5: #{tpu_custom_call.1} parent=1 // pred_fallthru
      _
    // Predicated region
    $region6: #{tpu_custom_call.1} parent=1 // pred_check
      _
    $region7: #{tpu_custom_call.1} parent=1 // pred_check_branch
      %29 = sbr.rel (0) target = $region9
    $region8: #{tpu_custom_call.1} parent=1 // pred_region
      %s30 = sadd.s32 0, 0
      %p31 = scmp.lt.s32.totalorder %s30, 0
      %s32 = scalar_select %p31, %s30, 0
      %s33 = smul.u32 8, %s32
      %s35 = ssub.s32 1024, 1024
      %36 = vsyncadd [#allocation6], %s35
      %s37 = smul.addr %s33, 128
      %s38 = scalar_lea.hbm %s1, %s37
      %s39 = sshll.u32 [#allocation5], 4
      %s40 = int_to_ptr.vmem [resolvable:$true] %s39
      %45 = dma.hbm_to_vmem [thread:$0]  %s38, 1024, %s40, [#allocation6], 128, 128, 8
    $region9: #{tpu_custom_call.1} parent=1 // pred_fallthru
      _
    // Predicated region
    $region10: #{tpu_custom_call.1} parent=1 // pred_check
      _
    $region11: #{tpu_custom_call.1} parent=1 // pred_check_branch
      %47 = sbr.rel (0) target = $region13
    $region12: #{tpu_custom_call.1} parent=1 // pred_region
      %48 = dma.done [#allocation3], 1024
    $region13: #{tpu_custom_call.1} parent=1 // pred_fallthru
      _
    // Predicated region
    $region14: #{tpu_custom_call.1} parent=1 // pred_check
      _
    $region15: #{tpu_custom_call.1} parent=1 // pred_check_branch
      %50 = sbr.rel (0) target = $region17
    $region16: #{tpu_custom_call.1} parent=1 // pred_region
      %51 = dma.done [#allocation6], 1024
    $region17: #{tpu_custom_call.1} parent=1 // pred_fallthru
      _
    %s52 = sadd.s32 0, 0
    %p53 = scmp.lt.s32.totalorder %s52, 0
    %s54 = scalar_select %p53, %s52, 0
    %s55 = smul.u32 8, %s54
    %s56 = sadd.s32 0, 0
    %p57 = scmp.lt.s32.totalorder %s56, 0
    %s58 = scalar_select %p57, %s56, 0
    %s59 = smul.u32 8, %s58
    %p60 = scmp.eq.s32.totalorder 0, 0
    // Predicated region
    $region18: #{tpu_custom_call.1} parent=1 // pred_check
      %p61 = pneg %p60
    $region19: #{tpu_custom_call.1} parent=1 // pred_check_branch
      %63 = sbr.rel (%p61) target = $region21
    $region20: #{tpu_custom_call.1} parent=1 // pred_region
      %64 = vst [vmem:[#allocation7] sm:$0xff] 0.0
      %65 = vst [vmem:[#allocation7 + $0x8] sm:$0xff] 0.0
      %66 = vst [vmem:[#allocation7 + $0x10] sm:$0xff] 0.0
    $region21: #{tpu_custom_call.1} parent=1 // pred_fallthru
      _
    %s67 = sadd.s32 0, 0
    %s68 = smul.u32 %s67, 64
    %s69 = sadd.s32 %s68, 64
    %p70 = scmp.le.s32.totalorder %s69, 16
    // Predicated region
    $region22: #{tpu_custom_call.1} parent=1 // pred_check
      %p71 = pneg %p70
    $region23: #{tpu_custom_call.1} parent=1 // pred_check_branch
      %73 = sbr.rel (%p71) target = $region25
    $region24: #{tpu_custom_call.1} parent=1 // pred_region
      %v74 = vld [vmem:[#allocation2] sm:$0xff]
      %v75 = vld [vmem:[#allocation2 + $0x8] sm:$0xff]
      %v76 = vld [vmem:[#allocation2 + $0x10] sm:$0xff]
      %v77 = vld [vmem:[#allocation2 + $0x18] sm:$0xff]
      %v78 = vld [vmem:[#allocation2 + $0x20] sm:$0xff]
      %v79 = vld [vmem:[#allocation2 + $0x28] sm:$0xff]
      %v80 = vld [vmem:[#allocation2 + $0x30] sm:$0xff]
      %v81 = vld [vmem:[#allocation2 + $0x38] sm:$0xff]
      %v82 = vld [vmem:[#allocation5] sm:$0xff]
      %v83 = vld [vmem:[#allocation5 + $0x8] sm:$0xff]
      %v84 = vld [vmem:[#allocation5 + $0x10] sm:$0xff]
      %v85 = vld [vmem:[#allocation5 + $0x18] sm:$0xff]
      %v86 = vld [vmem:[#allocation5 + $0x20] sm:$0xff]
      %v87 = vld [vmem:[#allocation5 + $0x28] sm:$0xff]
      %v88 = vld [vmem:[#allocation5 + $0x30] sm:$0xff]
      %v89 = vld [vmem:[#allocation5 + $0x38] sm:$0xff]
      %v90 = vmul.f32 %v74, %v82
      %v91 = vmul.f32 %v75, %v83
      %v92 = vmul.f32 %v76, %v84
      %v93 = vmul.f32 %v77, %v85
      %v94 = vmul.f32 %v78, %v86
      %v95 = vmul.f32 %v79, %v87
      %v96 = vmul.f32 %v80, %v88
      %v97 = vmul.f32 %v81, %v89
      %v98 = vadd.f32 %v90, %v91
      %v99 = vadd.f32 %v98, %v92
      %v100 = vadd.f32 %v99, %v93
      %v101 = vadd.f32 %v100, %v94
      %v102 = vadd.f32 %v101, %v95
      %v103 = vadd.f32 %v102, %v96
      %v104 = vadd.f32 %v103, %v97
      %v105 = vadd.f32 %v104, 0.0
      %v106 = vadd.f32 %v74, %v75
      %v107 = vadd.f32 %v106, %v76
      %v108 = vadd.f32 %v107, %v77
      %v109 = vadd.f32 %v108, %v78
      %v110 = vadd.f32 %v109, %v79
      %v111 = vadd.f32 %v110, %v80
      %v112 = vadd.f32 %v111, %v81
      %v113 = vadd.f32 %v112, 0.0
      %v114 = vadd.f32 %v82, %v83
      %v115 = vadd.f32 %v114, %v84
      %v116 = vadd.f32 %v115, %v85
      %v117 = vadd.f32 %v116, %v86
      %v118 = vadd.f32 %v117, %v87
      %v119 = vadd.f32 %v118, %v88
      %v120 = vadd.f32 %v119, %v89
      %v121 = vadd.f32 %v120, 0.0
      %v122 = vld [vmem:[#allocation7] sm:$0xff]
      %v123 = vadd.f32 %v122, %v105
      %124 = vst [vmem:[#allocation7] sm:$0xff] %v123
      %v125 = vld [vmem:[#allocation7 + $0x8] sm:$0xff]
      %v126 = vadd.f32 %v125, %v113
      %127 = vst [vmem:[#allocation7 + $0x8] sm:$0xff] %v126
      %v128 = vld [vmem:[#allocation7 + $0x10] sm:$0xff]
      %v129 = vadd.f32 %v128, %v121
      %130 = vst [vmem:[#allocation7 + $0x10] sm:$0xff] %v129
    $region25: #{tpu_custom_call.1} parent=1 // pred_fallthru
      _
    %p131 = scmp.gt.s32.totalorder %s69, 16
    // Predicated region
    $region26: #{tpu_custom_call.1} parent=1 // pred_check
      %p132 = pneg %p131
    $region27: #{tpu_custom_call.1} parent=1 // pred_check_branch
      %134 = sbr.rel (%p132) target = $region29
    $region28: #{tpu_custom_call.1} parent=1 // pred_region
      %v135 = vld [vmem:[#allocation2] sm:$0xff]
      %v136 = vld [vmem:[#allocation2 + $0x8] sm:$0xff]
      %v137 = vld [vmem:[#allocation2 + $0x10] sm:$0xff]
      %v138 = vld [vmem:[#allocation2 + $0x18] sm:$0xff]
      %v139 = vld [vmem:[#allocation2 + $0x20] sm:$0xff]
      %v140 = vld [vmem:[#allocation2 + $0x28] sm:$0xff]
      %v141 = vld [vmem:[#allocation2 + $0x30] sm:$0xff]
      %v142 = vld [vmem:[#allocation2 + $0x38] sm:$0xff]
      %v143 = vld [vmem:[#allocation5] sm:$0xff]
      %v144 = vld [vmem:[#allocation5 + $0x8] sm:$0xff]
      %v145 = vld [vmem:[#allocation5 + $0x10] sm:$0xff]
      %v146 = vld [vmem:[#allocation5 + $0x18] sm:$0xff]
      %v147 = vld [vmem:[#allocation5 + $0x20] sm:$0xff]
      %v148 = vld [vmem:[#allocation5 + $0x28] sm:$0xff]
      %v149 = vld [vmem:[#allocation5 + $0x30] sm:$0xff]
      %v150 = vld [vmem:[#allocation5 + $0x38] sm:$0xff]
      %v151 = vlaneseq
      %v152 = vshrl.u32 %v151, 7
      %v153 = vadd.s32 %v152, 8
      %v154 = vadd.s32 %v152, 16
      %v155 = vadd.s32 %v152, 24
      %v156 = vadd.s32 %v152, 32
      %v157 = vadd.s32 %v152, 40
      %v158 = vadd.s32 %v152, 48
      %v159 = vadd.s32 %v152, 56
      %v160 = vlaneseq
      %v161 = vand.u32 %v160, 127
      %v162 = vstv %s68
      %v163 = vadd.s32 %v162, %v152
      %v164 = vadd.s32 %v162, %v153
      %v165 = vadd.s32 %v162, %v154
      %v166 = vadd.s32 %v162, %v155
      %v167 = vadd.s32 %v162, %v156
      %v168 = vadd.s32 %v162, %v157
      %v169 = vadd.s32 %v162, %v158
      %v170 = vadd.s32 %v162, %v159
      %vm171 = vcmp.lt.s32.totalorder %v163, 16
      %vm172 = vcmp.lt.s32.totalorder %v164, 16
      %vm173 = vcmp.lt.s32.totalorder %v165, 16
      %vm174 = vcmp.lt.s32.totalorder %v166, 16
      %vm175 = vcmp.lt.s32.totalorder %v167, 16
      %vm176 = vcmp.lt.s32.totalorder %v168, 16
      %vm177 = vcmp.lt.s32.totalorder %v169, 16
      %vm178 = vcmp.lt.s32.totalorder %v170, 16
      %vm179 = vcmp.eq.s32.totalorder %v163, 16
      %vm180 = vcmp.eq.s32.totalorder %v164, 16
      %vm181 = vcmp.eq.s32.totalorder %v165, 16
      %vm182 = vcmp.eq.s32.totalorder %v166, 16
      %vm183 = vcmp.eq.s32.totalorder %v167, 16
      %vm184 = vcmp.eq.s32.totalorder %v168, 16
      %vm185 = vcmp.eq.s32.totalorder %v169, 16
      %vm186 = vcmp.eq.s32.totalorder %v170, 16
      %vm187 = vcmp.lt.s32.totalorder %v161, 0
      %vm188 = vmand %vm179, %vm187
      %vm189 = vmand %vm180, %vm187
      %vm190 = vmand %vm181, %vm187
      %vm191 = vmand %vm182, %vm187
      %vm192 = vmand %vm183, %vm187
      %vm193 = vmand %vm184, %vm187
      %vm194 = vmand %vm185, %vm187
      %vm195 = vmand %vm186, %vm187
      %vm196 = vmor %vm171, %vm188
      %vm197 = vmor %vm172, %vm189
      %vm198 = vmor %vm173, %vm190
      %vm199 = vmor %vm174, %vm191
      %vm200 = vmor %vm175, %vm192
      %vm201 = vmor %vm176, %vm193
      %vm202 = vmor %vm177, %vm194
      %vm203 = vmor %vm178, %vm195
      %v204 = vsel %vm196, %v135, 0.0
      %v205 = vsel %vm197, %v136, 0.0
      %v206 = vsel %vm198, %v137, 0.0
      %v207 = vsel %vm199, %v138, 0.0
      %v208 = vsel %vm200, %v139, 0.0
      %v209 = vsel %vm201, %v140, 0.0
      %v210 = vsel %vm202, %v141, 0.0
      %v211 = vsel %vm203, %v142, 0.0
      %v212 = vsel %vm196, %v143, 0.0
      %v213 = vsel %vm197, %v144, 0.0
      %v214 = vsel %vm198, %v145, 0.0
      %v215 = vsel %vm199, %v146, 0.0
      %v216 = vsel %vm200, %v147, 0.0
      %v217 = vsel %vm201, %v148, 0.0
      %v218 = vsel %vm202, %v149, 0.0
      %v219 = vsel %vm203, %v150, 0.0
      %v220 = vmul.f32 %v204, %v212
      %v221 = vmul.f32 %v205, %v213
      %v222 = vmul.f32 %v206, %v214
      %v223 = vmul.f32 %v207, %v215
      %v224 = vmul.f32 %v208, %v216
      %v225 = vmul.f32 %v209, %v217
      %v226 = vmul.f32 %v210, %v218
      %v227 = vmul.f32 %v211, %v219
      %v228 = vadd.f32 %v220, %v221
      %v229 = vadd.f32 %v228, %v222
      %v230 = vadd.f32 %v229, %v223
      %v231 = vadd.f32 %v230, %v224
      %v232 = vadd.f32 %v231, %v225
      %v233 = vadd.f32 %v232, %v226
      %v234 = vadd.f32 %v233, %v227
      %v235 = vadd.f32 %v234, 0.0
      %v236 = vadd.f32 %v204, %v205
      %v237 = vadd.f32 %v236, %v206
      %v238 = vadd.f32 %v237, %v207
      %v239 = vadd.f32 %v238, %v208
      %v240 = vadd.f32 %v239, %v209
      %v241 = vadd.f32 %v240, %v210
      %v242 = vadd.f32 %v241, %v211
      %v243 = vadd.f32 %v242, 0.0
      %v244 = vadd.f32 %v212, %v213
      %v245 = vadd.f32 %v244, %v214
      %v246 = vadd.f32 %v245, %v215
      %v247 = vadd.f32 %v246, %v216
      %v248 = vadd.f32 %v247, %v217
      %v249 = vadd.f32 %v248, %v218
      %v250 = vadd.f32 %v249, %v219
      %v251 = vadd.f32 %v250, 0.0
      %v252 = vld [vmem:[#allocation7] sm:$0xff]
      %v253 = vadd.f32 %v252, %v235
      %254 = vst [vmem:[#allocation7] sm:$0xff] %v253
      %v255 = vld [vmem:[#allocation7 + $0x8] sm:$0xff]
      %v256 = vadd.f32 %v255, %v243
      %257 = vst [vmem:[#allocation7 + $0x8] sm:$0xff] %v256
      %v258 = vld [vmem:[#allocation7 + $0x10] sm:$0xff]
      %v259 = vadd.f32 %v258, %v251
      %260 = vst [vmem:[#allocation7 + $0x10] sm:$0xff] %v259
    $region29: #{tpu_custom_call.1} parent=1 // pred_fallthru
      _
    // Predicated region
    $region30: #{tpu_custom_call.1} parent=1 // pred_check
      _
    $region31: #{tpu_custom_call.1} parent=1 // pred_check_branch
      %262 = sbr.rel (0) target = $region33
    $region32: #{tpu_custom_call.1} parent=1 // pred_region
      %s264 = ssub.s32 384, 384
      %265 = vsyncadd [#allocation4], %s264
      %s266 = sshll.u32 [#allocation7], 4
      %s267 = int_to_ptr.vmem [resolvable:$true] %s266
      %272 = dma.vmem_to_hbm [thread:$0]  %s267, 384, %s2, [#allocation4], 128, 128, 8
    $region33: #{tpu_custom_call.1} parent=1 // pred_fallthru
      _
    // Predicated region
    $region34: #{tpu_custom_call.1} parent=1 // pred_check
      _
    $region35: #{tpu_custom_call.1} parent=1 // pred_check_branch
      %274 = sbr.rel (0) target = $region37
    $region36: #{tpu_custom_call.1} parent=1 // pred_region
      %275 = dma.done [#allocation4], 384
    $region37: #{tpu_custom_call.1} parent=1 // pred_fallthru
      _
    %276 = vsyncpa [#allocation3], 1
    %277 = vsyncpa [#allocation6], 1
    %278 = vsyncpa [#allocation4], 1

</llo_original>
